<compile_context>
chip_gen: v7x
topology: tpu7x:2x2x1
jax: 0.10.0
libtpu: 0.0.40
codegen_flags: <defaults>
</compile_context>

<pallas_src>
import jax
import jax.numpy as jnp
from jax.experimental import pallas as pl
from jax.experimental.pallas import tpu as pltpu


def conv_bn_relu_kernel(x_ref, w_ref, shift_ref, o_ref, xp_ref):
    # x_ref:     (N, H, W*Cin)        un-padded input rows (f32), whole batch
    # w_ref:     (3*W*Cin, W*Cout)    structured conv weights, ky fused into K, BN scale folded (bf16)
    # shift_ref: (1, W*Cout)          folded BN shift (includes conv bias), tiled over W (f32)
    # o_ref:     (N, H, W*Cout)       lane-dense output rows (f32)
    # xp_ref:    (N, H+2, W*Cin)      VMEM scratch: per-image H-halo-padded rows (f32)
    N, H, WCi = x_ref.shape
    WCo = o_ref.shape[2]

    # Build the H halo in VMEM: zero ONLY the two halo rows per image, then drop the real
    # rows into the interior (sublane-offset store; rows 1..H are fully overwritten).
    halo = jnp.zeros((N, 1, WCi), dtype=xp_ref.dtype)
    xp_ref[:, 0:1, :] = halo
    xp_ref[:, H + 1:H + 2, :] = halo
    xp_ref[:, 1:H + 1, :] = x_ref[...]

    # Single load + single f32->bf16 cast of the padded slab, then fuse ky into K by
    # lane-concatenating the three H-shifted views -> (N, H, 3*W*Cin) -> (N*H, 3*W*Cin).
    xpb = xp_ref[...].astype(jnp.bfloat16)
    lhs = jnp.concatenate(
        [xpb[:, 0:H, :], xpb[:, 1:H + 1, :], xpb[:, 2:H + 2, :]], axis=-1
    ).reshape(N * H, 3 * WCi)

    # One MXU matmul for the entire batch (bf16 operands, f32 accumulation).
    acc = jnp.dot(lhs, w_ref[...], preferred_element_type=jnp.float32)   # (N*H, W*Cout)

    # Fused BN shift + ReLU epilogue (scale already folded into the weights), f32.
    y = jnp.maximum(acc + shift_ref[...], 0.0)
    o_ref[...] = y.reshape(N, H, WCo).astype(o_ref.dtype)


def _build_structured_weights(w_oihw, scale, W):
    """Build Wd: (3, W*Cin, W*Cout) with BN scale folded and pad=1 in W encoded as zeros.

    Wd[ky][xin*Cin + ci, x*Cout + co] = scale[co] * w[co, ci, ky, xin - x + 1]
        if 0 <= xin - x + 1 <= 2 else 0
    """
    Cout, Cin, _, _ = w_oihw.shape
    # OIHW -> HWIO, fold BN scale per output channel.
    w_hwio = jnp.transpose(w_oihw, (2, 3, 1, 0)) * scale[None, None, None, :]  # (3,3,Cin,Cout)

    xin = jnp.arange(W)[:, None]            # (W, 1) input column
    xout = jnp.arange(W)[None, :]           # (1, W) output column
    kx = xin - xout + 1                     # (W, W)
    valid = (kx >= 0) & (kx <= 2)
    kx_c = jnp.clip(kx, 0, 2)

    mats = []
    for ky in range(3):
        taps = w_hwio[ky][kx_c]                                  # (W, W, Cin, Cout) = [xin, x, ci, co]
        taps = jnp.where(valid[:, :, None, None], taps, 0.0)
        mats.append(taps.transpose(0, 2, 1, 3).reshape(W * Cin, W * Cout))  # rows xin*Cin+ci
    return jnp.stack(mats, axis=0)                               # (3, W*Cin, W*Cout)


def conv_bn_relu_rows(x_rows, w_oihw, conv_bias, gamma, beta, run_mean, run_var,
                      eps=1e-5):
    """Channel-last / lane-dense entry point.

    x_rows: (N, H, W*Cin) f32 rows (NHWC flattened over the last two dims).
    Returns (N, H, W*Cout) f32 rows.
    """
    N, H, WCi = x_rows.shape
    Cout, Cin = w_oihw.shape[0], w_oihw.shape[1]
    W = WCi // Cin

    # Fold BN (eval mode): scale into the weights, shift (incl. conv bias) is the only add.
    scale = gamma / jnp.sqrt(run_var + eps)                      # (Cout,)
    shift = beta + (conv_bias - run_mean) * scale                # (Cout,)

    # Structured weights with ky fused into K (bf16 for the MXU; f32 accumulate in-kernel).
    w_struct = _build_structured_weights(w_oihw.astype(jnp.float32), scale, W)
    w_fused = w_struct.reshape(3 * W * Cin, W * Cout).astype(jnp.bfloat16)

    # Shift tiled over W so it broadcasts over the lane-dense (N*H, W*Cout) rows.
    shift_row = jnp.tile(shift, W).reshape(1, W * Cout).astype(jnp.float32)

    # Single invocation (no grid): everything fits comfortably in VMEM at these shapes.
    # TODO(synk): emit bf16 output on v6e/v7x if the consumer tolerates it (halves writeback).
    return pl.pallas_call(
        conv_bn_relu_kernel,
        out_shape=jax.ShapeDtypeStruct((N, H, W * Cout), jnp.float32),
        in_specs=[
            pl.BlockSpec(memory_space=pltpu.MemorySpace.VMEM),   # x rows
            pl.BlockSpec(memory_space=pltpu.MemorySpace.VMEM),   # fused structured weights
            pl.BlockSpec(memory_space=pltpu.MemorySpace.VMEM),   # folded shift
        ],
        out_specs=pl.BlockSpec(memory_space=pltpu.MemorySpace.VMEM),
        scratch_shapes=[pltpu.VMEM((N, H + 2, W * Cin), jnp.float32)],
    )(x_rows, w_fused, shift_row)


def conv_bn_relu(x_nchw, w_oihw, conv_bias, gamma, beta, run_mean, run_var,
                 eps=1e-5):
    """NCHW adapter matching the PyTorch module interface. x_nchw: (N, Cin, H, W) f32."""
    N, Cin, H, W = x_nchw.shape
    Cout = w_oihw.shape[0]
    # These two layout transposes only exist to match the NCHW PyTorch convention; a
    # channel-last caller should use conv_bn_relu_rows directly and skip them.
    x_rows = jnp.transpose(x_nchw, (0, 2, 3, 1)).reshape(N, H, W * Cin).astype(jnp.float32)
    out_rows = conv_bn_relu_rows(x_rows, w_oihw, conv_bias, gamma, beta,
                                 run_mean, run_var, eps)
    return jnp.transpose(out_rows.reshape(N, H, W, Cout), (0, 3, 1, 2))


if __name__ == "__main__":
    # Small shapes consistent with the module: batch=2, nin=4, nout=8, spatial=16.
    N, Cin, Cout, H, W = 2, 4, 8, 16, 16

    key = jax.random.PRNGKey(0)
    k_x, k_w, k_b, k_g, k_be, k_m, k_v = jax.random.split(key, 7)

    x = jax.random.normal(k_x, (N, Cin, H, W), dtype=jnp.float32)

    # Conv2d(nin, nout, 3) parameters (deterministic init).
    w = jax.random.normal(k_w, (Cout, Cin, 3, 3), dtype=jnp.float32) * 0.1
    conv_bias = jax.random.normal(k_b, (Cout,), dtype=jnp.float32) * 0.1

    # BatchNorm2d(nout) parameters + running stats (deterministic init).
    gamma = 1.0 + 0.1 * jax.random.normal(k_g, (Cout,), dtype=jnp.float32)
    beta = 0.1 * jax.random.normal(k_be, (Cout,), dtype=jnp.float32)
    run_mean = 0.1 * jax.random.normal(k_m, (Cout,), dtype=jnp.float32)
    run_var = jnp.abs(1.0 + 0.1 * jax.random.normal(k_v, (Cout,),
                                                    dtype=jnp.float32))

    out = conv_bn_relu(x, w, conv_bias, gamma, beta, run_mean, run_var)
    out = jax.block_until_ready(out)
    assert out.shape == (N, Cout, H, W)
    assert bool(jnp.all(out >= 0.0))  # ReLU sanity check

    # Numerical sanity check against a plain XLA reference (loose tol: bf16 matmul operands).
    ref = jax.lax.conv_general_dilated(
        x, w, window_strides=(1, 1), padding=((1, 1), (1, 1)),
        dimension_numbers=("NCHW", "OIHW", "NCHW"))
    ref = ref + conv_bias[None, :, None, None]
    sc = (gamma / jnp.sqrt(run_var + 1e-5))[None, :, None, None]
    ref = (ref - run_mean[None, :, None, None]) * sc + beta[None, :, None, None]
    ref = jnp.maximum(ref, 0.0)
    max_err = float(jnp.max(jnp.abs(out - ref)))
    assert max_err < 0.1, f"max abs error {max_err} too large"

    print("KERNEL_OK")
</pallas_src>

<mosaic_0001>
module attributes {stable_mosaic.version = 11 : i64} {
  func.func @conv_bn_relu_kernel(%arg0: memref<2x16x64xf32, #tpu.memory_space<vmem>>, %arg1: memref<192x128xbf16, #tpu.memory_space<vmem>>, %arg2: memref<1x128xf32, #tpu.memory_space<vmem>>, %arg3: memref<2x16x128xf32, #tpu.memory_space<vmem>>, %arg4: memref<2x18x64xf32, #tpu.memory_space<vmem>>) attributes {dimension_semantics = [], scalar_prefetch = 0 : i64, scratch_operands = 1 : i64, tpu.core_type = #tpu.core_type<tc>} {
    %cst = arith.constant 0.000000e+00 : f32
    %0 = vector.broadcast %cst : f32 to vector<2x1x64xf32>
    %c0 = arith.constant 0 : index
    %c0_0 = arith.constant 0 : index
    %c0_1 = arith.constant 0 : index
    %1 = vector.load %arg4[%c0, %c0_0, %c0_1] : memref<2x18x64xf32, #tpu.memory_space<vmem>>, vector<2x1x64xf32>
    tpu.vector_store %arg4[%c0, %c0_0, %c0_1], %0 {strides = array<i32>} : memref<2x18x64xf32, #tpu.memory_space<vmem>>, vector<2x1x64xf32>,
    %c0_2 = arith.constant 0 : index
    %c17 = arith.constant 17 : index
    %c0_3 = arith.constant 0 : index
    %2 = vector.load %arg4[%c0_2, %c17, %c0_3] : memref<2x18x64xf32, #tpu.memory_space<vmem>>, vector<2x1x64xf32>
    tpu.vector_store %arg4[%c0_2, %c17, %c0_3], %0 {strides = array<i32>} : memref<2x18x64xf32, #tpu.memory_space<vmem>>, vector<2x1x64xf32>,
    %c0_4 = arith.constant 0 : index
    %c0_5 = arith.constant 0 : index
    %c0_6 = arith.constant 0 : index
    %3 = vector.load %arg0[%c0_4, %c0_5, %c0_6] : memref<2x16x64xf32, #tpu.memory_space<vmem>>, vector<2x16x64xf32>
    %c0_7 = arith.constant 0 : index
    %c1 = arith.constant 1 : index
    %c0_8 = arith.constant 0 : index
    %4 = vector.load %arg4[%c0_7, %c1, %c0_8] : memref<2x18x64xf32, #tpu.memory_space<vmem>>, vector<2x16x64xf32>
    tpu.vector_store %arg4[%c0_7, %c1, %c0_8], %3 {strides = array<i32>} : memref<2x18x64xf32, #tpu.memory_space<vmem>>, vector<2x16x64xf32>,
    %c0_9 = arith.constant 0 : index
    %c0_10 = arith.constant 0 : index
    %c0_11 = arith.constant 0 : index
    %5 = vector.load %arg4[%c0_9, %c0_10, %c0_11] : memref<2x18x64xf32, #tpu.memory_space<vmem>>, vector<2x18x64xf32>
    %6 = arith.truncf %5 : vector<2x18x64xf32> to vector<2x18x64xbf16>
    %7 = vector.extract_strided_slice %6 {offsets = [0, 0, 0], sizes = [2, 16, 64], strides = [1, 1, 1]} : vector<2x18x64xbf16> to vector<2x16x64xbf16>
    %8 = vector.extract_strided_slice %6 {offsets = [0, 1, 0], sizes = [2, 16, 64], strides = [1, 1, 1]} : vector<2x18x64xbf16> to vector<2x16x64xbf16>
    %9 = vector.extract_strided_slice %6 {offsets = [0, 2, 0], sizes = [2, 16, 64], strides = [1, 1, 1]} : vector<2x18x64xbf16> to vector<2x16x64xbf16>
    %10 = tpu.concatenate %7, %8, %9 in 2 : vector<2x16x64xbf16>, vector<2x16x64xbf16>, vector<2x16x64xbf16> -> vector<2x16x192xbf16>
    %11 = vector.shape_cast %10 : vector<2x16x192xbf16> to vector<32x192xbf16>
    %c0_12 = arith.constant 0 : index
    %c0_13 = arith.constant 0 : index
    %12 = vector.load %arg1[%c0_12, %c0_13] : memref<192x128xbf16, #tpu.memory_space<vmem>>, vector<192x128xbf16>
    %cst_14 = arith.constant dense<0.000000e+00> : vector<32x128xf32>
    %13 = tpu.matmul %11, %12, %cst_14 {dimension_numbers = #tpu.dot_dimension_numbers<[1], [0], [0], [1], [0, 0, 1, 1], [], []>} : vector<32x192xbf16>, vector<192x128xbf16>, vector<32x128xf32> -> vector<32x128xf32>
    %c0_15 = arith.constant 0 : index
    %c0_16 = arith.constant 0 : index
    %14 = vector.load %arg2[%c0_15, %c0_16] : memref<1x128xf32, #tpu.memory_space<vmem>>, vector<1x128xf32>
    %15 = vector.broadcast %14 : vector<1x128xf32> to vector<32x128xf32>
    %16 = arith.addf %13, %15 : vector<32x128xf32>
    %cst_17 = arith.constant 0.000000e+00 : f32
    %17 = vector.broadcast %cst_17 : f32 to vector<32x128xf32>
    %18 = arith.maximumf %16, %17 : vector<32x128xf32>
    %19 = vector.shape_cast %18 : vector<32x128xf32> to vector<2x16x128xf32>
    %c0_18 = arith.constant 0 : index
    %c0_19 = arith.constant 0 : index
    %c0_20 = arith.constant 0 : index
    %20 = vector.load %arg3[%c0_18, %c0_19, %c0_20] : memref<2x16x128xf32, #tpu.memory_space<vmem>>, vector<2x16x128xf32>
    tpu.vector_store %arg3[%c0_18, %c0_19, %c0_20], %19 {strides = array<i32>} : memref<2x16x128xf32, #tpu.memory_space<vmem>>, vector<2x16x128xf32>,
    return
  }
}

</mosaic_0001>

<llo_original>
// kernel: tpu_custom_call.1
$region0: #{tpu_custom_call.1}
  #allocation0 [shape = 'u32[]', space=smem, size = 0x4, offset = 0x4, fixed_abs, tag = 'smem constant byte address 0x4 - core index']
  #allocation1 [shape = 'u32[144,128]{1,0:T(1,128)}', space=vmem, size = 0x12000, scoped, tag = 'internal scratch']
  #allocation2 [shape = 'f32[2,18,64]{2,1,0:T(8,128)}', space=vmem, size = 0x6000, scoped, tag = 'scratch operand']
  %s0 = inlined_call_operand.hbm [shape: f32[2,16,64], index: 0, kind: input, shape index: {}]
  %s1 = inlined_call_operand.hbm [shape: bf16[192,128], index: 1, kind: input, shape index: {}]
  %s2 = inlined_call_operand.vmem [shape: f32[1,128], index: 2, kind: input, shape index: {}]
  %s3 = inlined_call_operand.hbm [shape: f32[2,16,128], index: 3, kind: output, shape index: {}]
  %s4 = sld [smem:[#allocation0]]
  $region30: #{tpu_custom_call.1} parent=0
    _
  %s6 = ssub.s32 1, %s4
  %s7 = scalar_select 0, %s6, %s4
  $region1: #{tpu_custom_call.1} parent=0
    #allocation3 [shape = 'u8[16384]{0}', space=vmem, size = 0x4000, scoped, tag = 'input window, operand 0, single buffered']
    #allocation4 [shape = 's32[1]{0}', space=sflag, size = 0x4, scoped, tag = 'scoped memory for tpu_custom_call.1']
    #allocation5 [shape = 's32[1]{0}', space=sflag, size = 0x4, scoped, tag = 'scoped memory for tpu_custom_call.1']
    #allocation6 [shape = 'u8[49152]{0}', space=vmem, size = 0xc000, scoped, tag = 'input window, operand 1, single buffered']
    #allocation7 [shape = 's32[1]{0}', space=sflag, size = 0x4, scoped, tag = 'scoped memory for tpu_custom_call.1']
    #allocation8 [shape = 'u8[16384]{0}', space=vmem, size = 0x4000, scoped, tag = 'output window, operand 0, single buffered']
    %8 = vsyncpa [#allocation4], 0
    %9 = vsyncpa [#allocation7], 0
    %10 = vsyncpa [#allocation5], 0
    // Predicated region
    $region2: #{tpu_custom_call.1} parent=1 // pred_check
      _
    $region3: #{tpu_custom_call.1} parent=1 // pred_check_branch
      %12 = sbr.rel (0) target = $region5
    $region4: #{tpu_custom_call.1} parent=1 // pred_region
      %s14 = ssub.s32 512, 512
      %15 = vsyncadd [#allocation4], %s14
      %s16 = sshll.u32 [#allocation3], 4
      %s17 = int_to_ptr.vmem [resolvable:$true] %s16
      %22 = dma.hbm_to_vmem [thread:$0]  %s0, 512, %s17, [#allocation4], 128, 128, 8
    $region5: #{tpu_custom_call.1} parent=1 // pred_fallthru
      _
    // Predicated region
    $region6: #{tpu_custom_call.1} parent=1 // pred_check
      _
    $region7: #{tpu_custom_call.1} parent=1 // pred_check_branch
      %24 = sbr.rel (0) target = $region9
    $region8: #{tpu_custom_call.1} parent=1 // pred_region
      %s26 = ssub.s32 1536, 1536
      %27 = vsyncadd [#allocation7], %s26
      %s28 = sshll.u32 [#allocation6], 4
      %s29 = int_to_ptr.vmem [resolvable:$true] %s28
      %34 = dma.hbm_to_vmem [thread:$0]  %s1, 1536, %s29, [#allocation7], 64, 64, 4
    $region9: #{tpu_custom_call.1} parent=1 // pred_fallthru
      _
    // Predicated region
    $region10: #{tpu_custom_call.1} parent=1 // pred_check
      _
    $region11: #{tpu_custom_call.1} parent=1 // pred_check_branch
      %36 = sbr.rel (0) target = $region13
    $region12: #{tpu_custom_call.1} parent=1 // pred_region
      _
    $region13: #{tpu_custom_call.1} parent=1 // pred_fallthru
      _
    // Predicated region
    $region14: #{tpu_custom_call.1} parent=1 // pred_check
      _
    $region15: #{tpu_custom_call.1} parent=1 // pred_check_branch
      %38 = sbr.rel (0) target = $region17
    $region16: #{tpu_custom_call.1} parent=1 // pred_region
      %39 = dma.done [#allocation4], 512
    $region17: #{tpu_custom_call.1} parent=1 // pred_fallthru
      _
    // Predicated region
    $region18: #{tpu_custom_call.1} parent=1 // pred_check
      _
    $region19: #{tpu_custom_call.1} parent=1 // pred_check_branch
      %41 = sbr.rel (0) target = $region21
    $region20: #{tpu_custom_call.1} parent=1 // pred_region
      %42 = dma.done [#allocation7], 1536
    $region21: #{tpu_custom_call.1} parent=1 // pred_fallthru
      _
    %vm44 = vcmask 516096
    %45 = vst.msk [vmem:[#allocation2] sm:$0x1] %vm44, 0.0
    %46 = vst.msk [vmem:[#allocation2 + $0x18] sm:$0x1] %vm44, 0.0
    %47 = vst.msk [vmem:[#allocation2 + $0x11] sm:$0x1] %vm44, 0.0
    %48 = vst.msk [vmem:[#allocation2 + $0x29] sm:$0x1] %vm44, 0.0
    %v49 = vld [vmem:[#allocation3] sm:$0xff]
    %v50 = vld [vmem:[#allocation3 + $0x8] sm:$0xff]
    %v51 = vld [vmem:[#allocation3 + $0x10] sm:$0xff]
    %v52 = vld [vmem:[#allocation3 + $0x18] sm:$0xff]
    %vm53 = vcmask 523264
    %54 = vst.msk [vmem:[#allocation2 + $0x1] sm:$0xff] %vm53, %v49
    %55 = vst.msk [vmem:[#allocation2 + $0x9] sm:$0xff] %vm53, %v50
    %56 = vst.msk [vmem:[#allocation2 + $0x19] sm:$0xff] %vm53, %v51
    %57 = vst.msk [vmem:[#allocation2 + $0x21] sm:$0xff] %vm53, %v52
    %v58 = vld [vmem:[#allocation2] sm:$0xff]
    %v59 = vld [vmem:[#allocation2 + $0x8] sm:$0xff]
    %v60 = vld [vmem:[#allocation2 + $0x10] sm:$0x3]
    %v61 = vld [vmem:[#allocation2 + $0x18] sm:$0xff]
    %v62 = vld [vmem:[#allocation2 + $0x20] sm:$0xff]
    %v63 = vld [vmem:[#allocation2 + $0x28] sm:$0x3]
    %v64 = vpack.c.bf16 %v59, %v58
    %v65 = vpack.c.bf16 %v60, %v60
    %v66 = vpack.c.bf16 %v62, %v61
    %v67 = vpack.c.bf16 %v63, %v63
    %vm68 = vsmask.f32 7424
    %v70 = vshrl.u32 %v64, 16
    %v72 = vshll.u32 %v64, 16
    %v74 = vrot.slane %v72, 1
    %v75 = vor.u32 %v70, %v74
    %v77 = vshll.u32 %v65, 16
    %v79 = vrot.slane %v77, 1
    %v80 = vsel %vm68, %v75, %v79
    %v82 = vshrl.u32 %v66, 16
    %v84 = vshll.u32 %v66, 16
    %v86 = vrot.slane %v84, 1
    %v87 = vor.u32 %v82, %v86
    %v89 = vshll.u32 %v67, 16
    %v91 = vrot.slane %v89, 1
    %v92 = vsel %vm68, %v87, %v91
    %93 = vrot.lane.b32.xlu0 %v80, 64
    %v94 = vpop.permute.xlu0 %93
    %95 = vrot.lane.b32.xlu0 %v92, 64
    %v96 = vpop.permute.xlu0 %95
    %vm101 = vcmask 1046528
    %v102 = vrot.slane %v64, 1
    %v103 = vrot.slane %v65, 1
    %v104 = vsel %vm101, %v102, %v103
    %v105 = vrot.slane %v66, 1
    %v106 = vrot.slane %v67, 1
    %v107 = vsel %vm101, %v105, %v106
    %v109 = vsel %vm53, %v64, %v94
    %v112 = vsel %vm53, %v66, %v96
    %v114 = vld [vmem:[#allocation6] sm:$0xf]
    %v115 = vld [vmem:[#allocation6 + $0x4] sm:$0xf]
    %v116 = vld [vmem:[#allocation6 + $0x8] sm:$0xf]
    %v117 = vld [vmem:[#allocation6 + $0xc] sm:$0xf]
    %v118 = vld [vmem:[#allocation6 + $0x10] sm:$0xf]
    %v119 = vld [vmem:[#allocation6 + $0x14] sm:$0xf]
    %v120 = vld [vmem:[#allocation6 + $0x18] sm:$0xf]
    %v121 = vld [vmem:[#allocation6 + $0x1c] sm:$0xf]
    %v122 = vld [vmem:[#allocation6 + $0x20] sm:$0xf]
    %v123 = vld [vmem:[#allocation6 + $0x24] sm:$0xf]
    %v124 = vld [vmem:[#allocation6 + $0x28] sm:$0xf]
    %v125 = vld [vmem:[#allocation6 + $0x2c] sm:$0xf]
    %v126 = vld [vmem:[#allocation6 + $0x30] sm:$0xf]
    %v127 = vld [vmem:[#allocation6 + $0x34] sm:$0xf]
    %v128 = vld [vmem:[#allocation6 + $0x38] sm:$0xf]
    %v129 = vld [vmem:[#allocation6 + $0x3c] sm:$0xf]
    %v130 = vld [vmem:[#allocation6 + $0x40] sm:$0xf]
    %v131 = vld [vmem:[#allocation6 + $0x44] sm:$0xf]
    %v132 = vld [vmem:[#allocation6 + $0x48] sm:$0xf]
    %v133 = vld [vmem:[#allocation6 + $0x4c] sm:$0xf]
    %v134 = vld [vmem:[#allocation6 + $0x50] sm:$0xf]
    %v135 = vld [vmem:[#allocation6 + $0x54] sm:$0xf]
    %v136 = vld [vmem:[#allocation6 + $0x58] sm:$0xf]
    %v137 = vld [vmem:[#allocation6 + $0x5c] sm:$0xf]
    %v138 = vld [vmem:[%s2] sm:$0x1]
    %v140 = vlaneseq
    %v141 = vshrl.u32 %v140, 7
    %v142 = vsub.s32 0, %v141
    %v143 = vrot.slane %v138, %v142
    %v169 = vunpack.c.l.b16 %v114
    %v170 = vunpack.c.l.b16 %v115
    %v171 = vunpack.c.l.b16 %v116
    %v172 = vunpack.c.l.b16 %v117
    %v173 = vunpack.c.l.b16 %v118
    %v174 = vunpack.c.l.b16 %v119
    %v175 = vunpack.c.l.b16 %v120
    %v176 = vunpack.c.l.b16 %v121
    %v177 = vunpack.c.l.b16 %v122
    %v178 = vunpack.c.l.b16 %v123
    %v179 = vunpack.c.l.b16 %v124
    %v180 = vunpack.c.l.b16 %v125
    %v181 = vunpack.c.l.b16 %v126
    %v182 = vunpack.c.l.b16 %v127
    %v183 = vunpack.c.l.b16 %v128
    %v184 = vunpack.c.l.b16 %v129
    %v185 = vunpack.c.l.b16 %v130
    %v186 = vunpack.c.l.b16 %v131
    %v187 = vunpack.c.l.b16 %v132
    %v188 = vunpack.c.l.b16 %v133
    %v189 = vunpack.c.l.b16 %v134
    %v190 = vunpack.c.l.b16 %v135
    %v191 = vunpack.c.l.b16 %v136
    %v192 = vunpack.c.l.b16 %v137
    %v193 = vpack.c.b16 %v170, %v169
    %v194 = vpack.c.b16 %v172, %v171
    %v195 = vpack.c.b16 %v174, %v173
    %v196 = vpack.c.b16 %v176, %v175
    %v197 = vpack.c.b16 %v178, %v177
    %v198 = vpack.c.b16 %v180, %v179
    %v199 = vpack.c.b16 %v182, %v181
    %v200 = vpack.c.b16 %v184, %v183
    %v201 = vpack.c.b16 %v186, %v185
    %v202 = vpack.c.b16 %v188, %v187
    %v203 = vpack.c.b16 %v190, %v189
    %v204 = vpack.c.b16 %v192, %v191
    %v218 = vsel %vm53, %v104, 0
    %v221 = vsel %vm53, %v107, 0
    %223 = vmatprep.subr.bf16.mxu0 0
    %224 = vmatpush1.bf16.msra.mxu0 %v193
    %225 = vmatprep.subr.bf16.mxu0 0
    %226 = vmatpush1.bf16.msra.mxu0 %v194
    %227 = vmatprep.subr.bf16.mxu0 0
    %228 = vmatpush1.bf16.msra.mxu0 %v195
    %229 = vmatprep.subr.bf16.mxu0 0
    %230 = vmatpush1.bf16.msra.mxu0 %v196
    %231 = vmatprep.subr.bf16.mxu0 0
    %232 = vmatpush1.bf16.msra.mxu0 %v197
    %233 = vmatprep.subr.bf16.mxu0 0
    %234 = vmatpush1.bf16.msra.mxu0 %v198
    %235 = vmatprep.subr.bf16.mxu0 0
    %236 = vmatpush1.bf16.msra.mxu0 %v199
    %237 = vmatprep.subr.bf16.mxu0 0
    %238 = vmatpush1.bf16.msra.mxu0 %v200
    %239 = vmatprep.subr.bf16.mxu0 0
    %240 = vmatpush1.bf16.msra.mxu0 %v201
    %241 = vmatprep.subr.bf16.mxu0 0
    %242 = vmatpush1.bf16.msra.mxu0 %v202
    %243 = vmatprep.subr.bf16.mxu0 0
    %244 = vmatpush1.bf16.msra.mxu0 %v203
    %245 = vmatprep.subr.bf16.mxu0 0
    %246 = vmatpush1.bf16.msra.mxu0 %v204
    %247 = vmatprep.subr.bf16.mxu0 0
    %248 = vmatpush1.bf16.msra.mxu0 0
    %249 = vmatprep.subr.bf16.mxu0 0
    %250 = vmatpush1.bf16.msra.mxu0 0
    %251 = vmatprep.subr.bf16.mxu0 0
    %252 = vmatpush1.bf16.msra.mxu0 0
    %253 = vmatprep.subr.bf16.mxu0 0
    %254 = vmatpush1.bf16.msra.mxu0 0
    %255 = vmatprep.mubr.bf16.mxu0 %v218
    %256 = vmatmul.mubr.bf16.gmra.mrb[0].mxu0 %v109
    %v257 = vpop.f32.mrb[0].mxu0
    %v258 = vadd.f32 %v143, %v257
    %v259 = vpop.f32.mrb[0].mxu0
    %v260 = vpop.f32.mrb[0].mxu0
    %v261 = vadd.f32 %v143, %v260
    %v262 = vpop.f32.mrb[0].mxu0
    %263 = vmatprep.mubr.bf16.mxu0 %v221
    %264 = vmatmul.mubr.bf16.gmra.mrb[0].mxu0 %v112
    %v265 = vpop.f32.mrb[0].mxu0
    %v266 = vadd.f32 %v143, %v265
    %v267 = vpop.f32.mrb[0].mxu0
    %v268 = vpop.f32.mrb[0].mxu0
    %v269 = vadd.f32 %v143, %v268
    %v270 = vpop.f32.mrb[0].mxu0
    %271 = vdwg.mxu0
    %v272 = vmax.f32 %v258, 0.0
    %v273 = vmax.f32 %v261, 0.0
    %v274 = vmax.f32 %v266, 0.0
    %v275 = vmax.f32 %v269, 0.0
    %276 = vst [vmem:[#allocation8] sm:$0xff] %v272
    %277 = vst [vmem:[#allocation8 + $0x8] sm:$0xff] %v273
    %278 = vst [vmem:[#allocation8 + $0x10] sm:$0xff] %v274
    %279 = vst [vmem:[#allocation8 + $0x18] sm:$0xff] %v275
    // Predicated region
    $region22: #{tpu_custom_call.1} parent=1 // pred_check
      _
    $region23: #{tpu_custom_call.1} parent=1 // pred_check_branch
      %281 = sbr.rel (0) target = $region25
    $region24: #{tpu_custom_call.1} parent=1 // pred_region
      %s283 = ssub.s32 512, 512
      %284 = vsyncadd [#allocation5], %s283
      %s285 = sshll.u32 [#allocation8], 4
      %s286 = int_to_ptr.vmem [resolvable:$true] %s285
      %291 = dma.vmem_to_hbm [thread:$0]  %s286, 512, %s3, [#allocation5], 128, 128, 8
    $region25: #{tpu_custom_call.1} parent=1 // pred_fallthru
      _
    // Predicated region
    $region26: #{tpu_custom_call.1} parent=1 // pred_check
      _
    $region27: #{tpu_custom_call.1} parent=1 // pred_check_branch
      %293 = sbr.rel (0) target = $region29
    $region28: #{tpu_custom_call.1} parent=1 // pred_region
      %294 = dma.done [#allocation5], 512
    $region29: #{tpu_custom_call.1} parent=1 // pred_fallthru
      _
    %295 = vsyncpa [#allocation4], 1
    %296 = vsyncpa [#allocation7], 1
    %297 = vsyncpa [#allocation5], 1

</llo_original>
